<compile_context>
chip_gen: v6e
topology: v6e:2x2x1
jax: 0.10.0
libtpu: 0.0.40
codegen_flags: <defaults>
</compile_context>

<pallas_src>
import functools

import jax
import jax.numpy as jnp
from jax.experimental import pallas as pl
from jax.experimental.pallas import tpu as pltpu

EPS = 1e-5


def _upconv_kernel(u_ref, w_ref, b_ref, o_ref, *, cout, two_w, tile):
    # u_ref: (1, Cin, T)    2x2-upsampled input, flattened over (2H, 2W), one tile
    # w_ref: (4*Cout, Cin)  BN-folded transposed-conv taps, rows ordered (ki, kj, cout)
    # b_ref: (4*Cout, 1)    BN-folded per-tap bias (f32)
    # o_ref: (1, Cout, T)   output, flattened over (2H, 2W), same tile (final layout)
    u = u_ref[0]                                                      # (Cin, T)
    a = jnp.dot(w_ref[...], u, preferred_element_type=jnp.float32)    # (4*Cout, T)
    a = a + b_ref[...]                                                # per-tap bias

    # Global flat position of every lane inside the (2H, 2W) output image.
    q = jax.lax.broadcasted_iota(jnp.int32, (1, tile), 1) + pl.program_id(1) * tile
    kj_odd = (q & 1) == 1                      # output column parity
    if two_w & (two_w - 1) == 0:               # power-of-two width: shift, no division
        row = q >> (two_w.bit_length() - 1)
    else:
        row = q // two_w                       # TODO(synk): vector s32 div for non-pow2 widths
    ki_odd = (row & 1) == 1                    # output row parity

    a00 = a[0 * cout:1 * cout]                 # tap (ki=0, kj=0)
    a01 = a[1 * cout:2 * cout]                 # tap (ki=0, kj=1)
    a10 = a[2 * cout:3 * cout]                 # tap (ki=1, kj=0)
    a11 = a[3 * cout:4 * cout]                 # tap (ki=1, kj=1)
    top = jnp.where(kj_odd, a01, a00)          # even output rows
    bot = jnp.where(kj_odd, a11, a10)          # odd output rows
    y = jnp.where(ki_odd, bot, top)
    o_ref[0] = jnp.maximum(y, 0.0).astype(o_ref.dtype)


def _pick_flat_tile(total, cin, cout, itemsize, n_batch,
                    budget_bytes=8 * 1024 * 1024, max_lanes=32768):
    """Largest 128-multiple divisor of `total` fitting a per-step VMEM budget."""
    # double-buffered in/out blocks + in-kernel f32 temporaries, per output lane
    bytes_per_lane = 2 * itemsize * (cin + cout) + 4 * (5 * cout + 4)
    cap = min(max_lanes, max(128, budget_bytes // bytes_per_lane))
    min_tiles = 2 if n_batch == 1 else 1       # give v7x's second TensorCore work
    if total <= cap and min_tiles == 1:
        return total                           # one full, lane-dense block
    start = (min(cap, total) // 128) * 128
    for t in range(start, 127, -128):
        if total % t == 0 and total // t >= min_tiles:
            return t
    # No 128-aligned divisor under the cap: fall back to a single full block
    # (always a legal BlockSpec; only hit for small / awkward image sizes).
    return total


def upconv(x_nchw, gamma, beta, weight, bias):
    """BatchNorm2d (training-mode batch stats) -> ConvTranspose2d(k=2, s=2) -> ReLU.

    x_nchw: (N, Cin, H, W); weight: (Cin, Cout, 2, 2) (nn.ConvTranspose2d layout);
    bias: (Cout,); gamma/beta: (Cin,).  Returns (N, Cout, 2H, 2W).
    """
    N, Cin, H, W = x_nchw.shape
    Cout = weight.shape[1]
    HW4 = 4 * H * W

    cdt = jnp.bfloat16 if x_nchw.dtype == jnp.bfloat16 else jnp.float32
    x = x_nchw.astype(cdt)

    # ---- BatchNorm (training mode) statistics: one fused pass, f32 accumulation ----
    x32 = x.astype(jnp.float32)
    mean = jnp.mean(x32, axis=(0, 2, 3))                      # (Cin,)
    mean_sq = jnp.mean(jnp.square(x32), axis=(0, 2, 3))       # (Cin,)
    var = mean_sq - jnp.square(mean)                          # biased variance
    scale = gamma.astype(jnp.float32) * jax.lax.rsqrt(var + EPS)
    shift = beta.astype(jnp.float32) - mean * scale
    # TODO(synk): running_mean/var buffer updates (momentum) of nn.BatchNorm2d are not
    # modelled; this matches only the forward activation math.

    # ---- Fold BN into the 2x2 transposed-conv taps, rows ordered (ki, kj, cout) -----
    w_taps = jnp.transpose(weight.astype(jnp.float32), (2, 3, 1, 0)).reshape(4 * Cout, Cin)
    w_folded = (w_taps * scale[None, :]).astype(cdt)                         # (4*Cout, Cin)
    b_folded = (jnp.tile(bias.astype(jnp.float32), 4) + w_taps @ shift).reshape(4 * Cout, 1)

    # ---- Nearest-neighbour 2x upsample of the raw input (BN lives in the weights).
    # U[n, c, q] with q flat over (2H, 2W) equals x[n, c, q // (4W), (q % (2W)) // 2].
    u = jnp.broadcast_to(x[:, :, :, None, :, None], (N, Cin, H, 2, W, 2))
    u = u.reshape(N, Cin, HW4)

    tile = _pick_flat_tile(HW4, Cin, Cout, jnp.dtype(cdt).itemsize, N)
    n_tiles = HW4 // tile

    kernel = functools.partial(_upconv_kernel, cout=Cout, two_w=2 * W, tile=tile)

    flops = 2 * N * (4 * Cout) * Cin * HW4
    bytes_accessed = (jnp.dtype(cdt).itemsize * N * HW4 * (Cin + Cout)
                      + 4 * (4 * Cout * (Cin + 1)))

    out_flat = pl.pallas_call(
        kernel,
        out_shape=jax.ShapeDtypeStruct((N, Cout, HW4), cdt),
        grid=(N, n_tiles),
        in_specs=[
            pl.BlockSpec((1, Cin, tile), lambda n, j: (n, 0, j)),
            pl.BlockSpec((4 * Cout, Cin), lambda n, j: (0, 0)),   # VMEM-resident weights
            pl.BlockSpec((4 * Cout, 1), lambda n, j: (0, 0)),     # VMEM-resident bias
        ],
        out_specs=pl.BlockSpec((1, Cout, tile), lambda n, j: (n, 0, j)),
        compiler_params=pltpu.CompilerParams(
            dimension_semantics=("parallel", "parallel"),
            vmem_limit_bytes=32 * 1024 * 1024,
        ),
        cost_estimate=pl.CostEstimate(
            flops=flops, transcendentals=0, bytes_accessed=bytes_accessed),
    )(u, w_folded, b_folded)

    # Free view: the kernel already wrote the final (N, Cout, 2H, 2W) memory layout.
    return out_flat.reshape(N, Cout, 2 * H, 2 * W)


def upconv_reference(x, gamma, beta, weight, bias):
    """Pure-JAX reference matching the PyTorch module forward (training-mode BN)."""
    mean = jnp.mean(x, axis=(0, 2, 3), keepdims=True)
    var = jnp.mean((x - mean) ** 2, axis=(0, 2, 3), keepdims=True)
    xn = (x - mean) / jnp.sqrt(var + EPS)
    xn = xn * gamma.reshape(1, -1, 1, 1) + beta.reshape(1, -1, 1, 1)
    N, Cin, H, W = x.shape
    Cout = weight.shape[1]
    y = jnp.einsum("nchw,cokl->nohkwl", xn, weight)
    y = y.reshape(N, Cout, 2 * H, 2 * W) + bias.reshape(1, -1, 1, 1)
    return jnp.maximum(y, 0.0)


if __name__ == "__main__":
    N, Cin, Cout, H, W = 2, 4, 8, 16, 16

    key = jax.random.PRNGKey(0)
    kx, kw, kb, kg, kbeta = jax.random.split(key, 5)

    x = jax.random.normal(kx, (N, Cin, H, W), dtype=jnp.float32)
    # nn.ConvTranspose2d weight layout: (in_channels, out_channels, kH, kW)
    weight = jax.random.normal(kw, (Cin, Cout, 2, 2), dtype=jnp.float32) * 0.1
    bias = jax.random.normal(kb, (Cout,), dtype=jnp.float32) * 0.1
    gamma = 1.0 + 0.1 * jax.random.normal(kg, (Cin,), dtype=jnp.float32)
    beta = 0.1 * jax.random.normal(kbeta, (Cin,), dtype=jnp.float32)

    out = jax.block_until_ready(jax.jit(upconv)(x, gamma, beta, weight, bias))
    ref = jax.block_until_ready(upconv_reference(x, gamma, beta, weight, bias))

    assert out.shape == (N, Cout, 2 * H, 2 * W), out.shape
    assert jnp.allclose(out, ref, atol=1e-4, rtol=1e-4), float(jnp.max(jnp.abs(out - ref)))

    print("KERNEL_OK")
</pallas_src>

<mosaic_0001>
module attributes {stable_mosaic.version = 11 : i64} {
  func.func @_upconv_kernel(%arg0: i32, %arg1: i32, %arg2: memref<1x4x1024xf32, #tpu.memory_space<vmem>>, %arg3: memref<32x4xf32, #tpu.memory_space<vmem>>, %arg4: memref<32x1xf32, #tpu.memory_space<vmem>>, %arg5: memref<1x8x1024xf32, #tpu.memory_space<vmem>>) attributes {dimension_semantics = [#tpu.dimension_semantics<parallel>, #tpu.dimension_semantics<parallel>], iteration_bounds = array<i64: 2, 1>, scalar_prefetch = 0 : i64, scratch_operands = 0 : i64, tpu.core_type = #tpu.core_type<tc>, window_params = [{transform_indices = @transform_0, window_bounds = array<i64: 1, 4, 1024>}, {pipeline_mode = #tpu.pipeline_mode<synchronous>, transform_indices = @transform_1, window_bounds = array<i64: 32, 4>}, {pipeline_mode = #tpu.pipeline_mode<synchronous>, transform_indices = @transform_2, window_bounds = array<i64: 32, 1>}, {transform_indices = @transform_3, window_bounds = array<i64: 1, 8, 1024>}]} {
    %c0 = arith.constant 0 : index
    %c0_0 = arith.constant 0 : index
    %c0_1 = arith.constant 0 : index
    %0 = vector.load %arg2[%c0, %c0_0, %c0_1] : memref<1x4x1024xf32, #tpu.memory_space<vmem>>, vector<1x4x1024xf32>
    %1 = vector.shape_cast %0 : vector<1x4x1024xf32> to vector<4x1024xf32>
    %c0_2 = arith.constant 0 : index
    %c0_3 = arith.constant 0 : index
    %2 = vector.load %arg3[%c0_2, %c0_3] : memref<32x4xf32, #tpu.memory_space<vmem>>, vector<32x4xf32>
    %cst = arith.constant dense<0.000000e+00> : vector<32x1024xf32>
    %3 = tpu.matmul %2, %1, %cst {dimension_numbers = #tpu.dot_dimension_numbers<[1], [0], [0], [1], [0, 0, 1, 1], [], []>} : vector<32x4xf32>, vector<4x1024xf32>, vector<32x1024xf32> -> vector<32x1024xf32>
    %c0_4 = arith.constant 0 : index
    %c0_5 = arith.constant 0 : index
    %4 = vector.load %arg4[%c0_4, %c0_5] : memref<32x1xf32, #tpu.memory_space<vmem>>, vector<32x1xf32>
    %5 = vector.broadcast %4 : vector<32x1xf32> to vector<32x1024xf32>
    %6 = arith.addf %3, %5 : vector<32x1024xf32>
    %7 = tpu.iota {dimensions = array<i32: 1>} : vector<1x1024xi32>
    %c1024_i32 = arith.constant 1024 : i32
    %8 = arith.muli %arg1, %c1024_i32 : i32
    %9 = vector.broadcast %8 : i32 to vector<1x1024xi32>
    %10 = arith.addi %7, %9 : vector<1x1024xi32>
    %c1_i32 = arith.constant 1 : i32
    %11 = vector.broadcast %c1_i32 : i32 to vector<1x1024xi32>
    %12 = arith.andi %10, %11 : vector<1x1024xi32>
    %c1_i32_6 = arith.constant 1 : i32
    %13 = vector.broadcast %c1_i32_6 : i32 to vector<1x1024xi32>
    %14 = arith.cmpi eq, %12, %13 : vector<1x1024xi32>
    %c5_i32 = arith.constant 5 : i32
    %15 = vector.broadcast %c5_i32 : i32 to vector<1x1024xi32>
    %16 = arith.shrsi %10, %15 : vector<1x1024xi32>
    %c1_i32_7 = arith.constant 1 : i32
    %17 = vector.broadcast %c1_i32_7 : i32 to vector<1x1024xi32>
    %18 = arith.andi %16, %17 : vector<1x1024xi32>
    %c1_i32_8 = arith.constant 1 : i32
    %19 = vector.broadcast %c1_i32_8 : i32 to vector<1x1024xi32>
    %20 = arith.cmpi eq, %18, %19 : vector<1x1024xi32>
    %21 = vector.extract_strided_slice %6 {offsets = [0, 0], sizes = [8, 1024], strides = [1, 1]} : vector<32x1024xf32> to vector<8x1024xf32>
    %22 = vector.extract_strided_slice %6 {offsets = [8, 0], sizes = [8, 1024], strides = [1, 1]} : vector<32x1024xf32> to vector<8x1024xf32>
    %23 = vector.extract_strided_slice %6 {offsets = [16, 0], sizes = [8, 1024], strides = [1, 1]} : vector<32x1024xf32> to vector<8x1024xf32>
    %24 = vector.extract_strided_slice %6 {offsets = [24, 0], sizes = [8, 1024], strides = [1, 1]} : vector<32x1024xf32> to vector<8x1024xf32>
    %25 = vector.shape_cast %14 : vector<1x1024xi1> to vector<1x1024xi1>
    %26 = vector.broadcast %25 : vector<1x1024xi1> to vector<8x1024xi1>
    %27 = arith.select %26, %22, %21 : vector<8x1024xi1>, vector<8x1024xf32>
    %28 = vector.shape_cast %14 : vector<1x1024xi1> to vector<1x1024xi1>
    %29 = vector.broadcast %28 : vector<1x1024xi1> to vector<8x1024xi1>
    %30 = arith.select %29, %24, %23 : vector<8x1024xi1>, vector<8x1024xf32>
    %31 = vector.shape_cast %20 : vector<1x1024xi1> to vector<1x1024xi1>
    %32 = vector.broadcast %31 : vector<1x1024xi1> to vector<8x1024xi1>
    %33 = arith.select %32, %30, %27 : vector<8x1024xi1>, vector<8x1024xf32>
    %cst_9 = arith.constant 0.000000e+00 : f32
    %34 = vector.broadcast %cst_9 : f32 to vector<8x1024xf32>
    %35 = arith.maximumf %33, %34 : vector<8x1024xf32>
    %c0_10 = arith.constant 0 : index
    %c0_11 = arith.constant 0 : index
    %c0_12 = arith.constant 0 : index
    %36 = vector.load %arg5[%c0_10, %c0_11, %c0_12] : memref<1x8x1024xf32, #tpu.memory_space<vmem>>, vector<1x8x1024xf32>
    %37 = vector.shape_cast %36 : vector<1x8x1024xf32> to vector<8x1024xf32>
    %38 = vector.shape_cast %35 : vector<8x1024xf32> to vector<1x8x1024xf32>
    tpu.vector_store %arg5[%c0_10, %c0_11, %c0_12], %38 {strides = array<i32>} : memref<1x8x1024xf32, #tpu.memory_space<vmem>>, vector<1x8x1024xf32>,
    return
  }
  func.func @transform_0(%arg0: i32, %arg1: i32) -> (i32, i32, i32) {
    %c0_i32 = arith.constant 0 : i32
    %c0_i32_0 = arith.constant 0 : i32
    return %arg0, %c0_i32, %arg1 : i32, i32, i32
  }
  func.func @transform_1(%arg0: i32, %arg1: i32) -> (i32, i32) {
    %c0_i32 = arith.constant 0 : i32
    %c0_i32_0 = arith.constant 0 : i32
    %c0_i32_1 = arith.constant 0 : i32
    return %c0_i32, %c0_i32_0 : i32, i32
  }
  func.func @transform_2(%arg0: i32, %arg1: i32) -> (i32, i32) {
    %c0_i32 = arith.constant 0 : i32
    %c0_i32_0 = arith.constant 0 : i32
    %c0_i32_1 = arith.constant 0 : i32
    return %c0_i32, %c0_i32_0 : i32, i32
  }
  func.func @transform_3(%arg0: i32, %arg1: i32) -> (i32, i32, i32) {
    %c0_i32 = arith.constant 0 : i32
    %c0_i32_0 = arith.constant 0 : i32
    return %arg0, %c0_i32, %arg1 : i32, i32, i32
  }
}

</mosaic_0001>

<llo_original>
// kernel: tile.8
$region0: #{tile.8}
  #allocation0 [shape = 's32[1]{0}', space=sflag, size = 0x4, scoped, tag = 'scoped memory for tile.8']
  %s0 = inlined_call_operand.vmem [shape: f32[8], index: 0, kind: input, shape index: {}]
  %s1 = inlined_call_operand.vmem [shape: f32[4,8], index: 1, kind: output, shape index: {}]
  // Predicated region
  $region2: #{tile.8} parent=0 // pred_check
    _
  $region3: #{tile.8} parent=0 // pred_check_branch
    %3 = sbr.rel (0) target = $region5
  $region4: #{tile.8} parent=0 // pred_region
    _
  $region5: #{tile.8} parent=0 // pred_fallthru
    _
  %v4 = vld [vmem:[%s0] ss:$0 sm:$0xff]
  %5 = vst [vmem:[%s1] sm:$0xf] %v4

// kernel: upconv.1
$region0: #{upconv.1}
  #allocation0 [shape = 'u32[]', space=smem, size = 0x4, offset = 0x4, fixed_abs, tag = 'smem constant byte address 0x4 - core index']
  #allocation1 [shape = 'u32[144,128]{1,0:T(1,128)}', space=vmem, size = 0x12000, scoped, tag = 'internal scratch']
  %s0 = inlined_call_operand.vmem [shape: f32[2,4,1024], index: 0, kind: input, shape index: {}]
  %s1 = inlined_call_operand.vmem [shape: f32[32,4], index: 1, kind: input, shape index: {}]
  %s2 = inlined_call_operand.vmem [shape: f32[32,1], index: 2, kind: input, shape index: {}]
  %s3 = inlined_call_operand.vmem [shape: f32[2,8,1024], index: 3, kind: output, shape index: {}]
  %s4 = sld [smem:[#allocation0]]
  $region45: #{upconv.1} parent=0
    _
  %s6 = ssub.s32 1, %s4
  %s7 = scalar_select 0, %s6, %s4
  loop: start=0, step=1, limit=4
  $region2: #{upconv.1} parent=0 // loop_pre_header
    _
  $region3: #{upconv.1} parent=0 // loop_header
    %s9 = sphi 0, %s13
    %p10 = scmp.ge.s32.totalorder %s9, 4
    %s16 = sphi 0, %s28
    %s17 = sphi 0, %s24
    %s18 = sphi 0, %s16
    %s19 = sphi 0, %s17
    %s20 = sphi 0, %s18
    %s21 = sphi 0, %s19
    %s33 = sphi 0, %s35
    %s36 = sphi 0, %s33
    %s37 = sphi 0, %s36
    %s53 = sphi 0, %s37
    %s57 = sphi 0, %s57
    %s59 = sphi 0, %s57
    %s60 = sphi 0, %s59
    %s74 = sphi 0, %s60
    %s78 = sphi 0, %s78
    %s80 = sphi 0, %s78
    %s81 = sphi 0, %s80
    %s95 = sphi 0, %s81
    %s103 = sphi 0, %s105
    %s106 = sphi 0, %s103
    %s107 = sphi 0, %s106
    %s123 = sphi 0, %s107
  $region4: #{upconv.1} parent=0 // loop_header_branch
    %12 = sbr.rel (%p10) target = $region8
  $region5: #{upconv.1} parent=0 // loop_body
    %s14 = ssub.s32 %s9, 1
    %s15 = ssub.s32 %s9, 2
    %s22 = sadd.s32 1, %s17
    %p23 = scmp.ge.s32.totalorder %s22, 1
    %s24 = scalar_select %p23, 0, %s22
    %s25 = sadd.s32 1, %s16
    %s26 = scalar_select %p23, %s25, %s16
    %p27 = scmp.ge.s32.totalorder %s26, 2
    %s28 = scalar_select %p27, 0, %s26
    %s29 = ssub.s32 %s16, %s28
    %s30 = ssub.s32 %s17, %s24
    %s31 = sor.u32 %s29, %s30
    %p32 = scmp.eq.s32.totalorder %s31, 0
    %s34 = sadd.s32 %s33, 1
    %s35 = scalar_select %p32, %s33, %s34
    %p38 = pneg %p32
    %p39 = scmp.eq.s32.totalorder %s9, 1
    %p40 = por %p38, %p39
    %p41 = scmp.ne.s32.totalorder %s33, %s36
    %p42 = scmp.eq.s32.totalorder %s9, 0
    %p43 = por %p41, %p42
    %p44 = scmp.ne.s32.totalorder %s33, %s36
    %p45 = scmp.eq.s32.totalorder %s14, 1
    %p46 = por %p44, %p45
    %p47 = scmp.ne.s32.totalorder %s36, %s37
    %p48 = scmp.eq.s32.totalorder %s14, 0
    %p49 = por %p47, %p48
    %p50 = scmp.ne.s32.totalorder %s36, %s37
    %p51 = scmp.eq.s32.totalorder %s15, 1
    %p52 = por %p50, %p51
    %p54 = scmp.ne.s32.totalorder %s37, %s53
    %p55 = scmp.eq.s32.totalorder %s15, 0
    %p56 = por %p54, %p55
    %s58 = sadd.s32 %s57, 1
    %p61 = scmp.eq.s32.totalorder %s9, 1
    %p62 = scmp.ne.s32.totalorder %s57, %s59
    %p63 = scmp.eq.s32.totalorder %s9, 0
    %p64 = por %p62, %p63
    %p65 = scmp.ne.s32.totalorder %s57, %s59
    %p66 = scmp.eq.s32.totalorder %s14, 1
    %p67 = por %p65, %p66
    %p68 = scmp.ne.s32.totalorder %s59, %s60
    %p69 = scmp.eq.s32.totalorder %s14, 0
    %p70 = por %p68, %p69
    %p71 = scmp.ne.s32.totalorder %s59, %s60
    %p72 = scmp.eq.s32.totalorder %s15, 1
    %p73 = por %p71, %p72
    %p75 = scmp.ne.s32.totalorder %s60, %s74
    %p76 = scmp.eq.s32.totalorder %s15, 0
    %p77 = por %p75, %p76
    %s79 = sadd.s32 %s78, 1
    %p82 = scmp.eq.s32.totalorder %s9, 1
    %p83 = scmp.ne.s32.totalorder %s78, %s80
    %p84 = scmp.eq.s32.totalorder %s9, 0
    %p85 = por %p83, %p84
    %p86 = scmp.ne.s32.totalorder %s78, %s80
    %p87 = scmp.eq.s32.totalorder %s14, 1
    %p88 = por %p86, %p87
    %p89 = scmp.ne.s32.totalorder %s80, %s81
    %p90 = scmp.eq.s32.totalorder %s14, 0
    %p91 = por %p89, %p90
    %p92 = scmp.ne.s32.totalorder %s80, %s81
    %p93 = scmp.eq.s32.totalorder %s15, 1
    %p94 = por %p92, %p93
    %p96 = scmp.ne.s32.totalorder %s81, %s95
    %p97 = scmp.eq.s32.totalorder %s15, 0
    %p98 = por %p96, %p97
    %s99 = ssub.s32 %s16, %s28
    %s100 = ssub.s32 %s17, %s24
    %s101 = sor.u32 %s99, %s100
    %p102 = scmp.eq.s32.totalorder %s101, 0
    %s104 = sadd.s32 %s103, 1
    %s105 = scalar_select %p102, %s103, %s104
    %p108 = pneg %p102
    %p109 = scmp.eq.s32.totalorder %s9, 1
    %p110 = por %p108, %p109
    %p111 = scmp.ne.s32.totalorder %s103, %s106
    %p112 = scmp.eq.s32.totalorder %s9, 0
    %p113 = por %p111, %p112
    %p114 = scmp.ne.s32.totalorder %s103, %s106
    %p115 = scmp.eq.s32.totalorder %s14, 1
    %p116 = por %p114, %p115
    %p117 = scmp.ne.s32.totalorder %s106, %s107
    %p118 = scmp.eq.s32.totalorder %s14, 0
    %p119 = por %p117, %p118
    %p120 = scmp.ne.s32.totalorder %s106, %s107
    %p121 = scmp.eq.s32.totalorder %s15, 1
    %p122 = por %p120, %p121
    %p124 = scmp.ne.s32.totalorder %s107, %s123
    %p125 = scmp.eq.s32.totalorder %s15, 0
    %p126 = por %p124, %p125
    %p127 = scmp.le.s32.totalorder 1, %s9
    %p128 = scmp.lt.s32.totalorder %s9, 3
    %p129 = pnand %p127, %p128
    %p130 = pneg %p129
    // Predicated region
    $region9: #{upconv.1} parent=5 // pred_check
      _
    $region10: #{upconv.1} parent=5 // pred_check_branch
      %132 = sbr.rel (%p129) target = $region12
    $region11: #{upconv.1} parent=5 // pred_region
      %s133 = ssub.s32 %s9, 1
      // Predicated region
      $region13: #{upconv.1} parent=11 // pred_check
        %p134 = pneg %p70
      $region14: #{upconv.1} parent=11 // pred_check_branch
        %136 = sbr.rel (%p134) target = $region16
      $region15: #{upconv.1} parent=11 // pred_region
        _
      $region16: #{upconv.1} parent=11 // pred_fallthru
        _
      // Predicated region
      $region17: #{upconv.1} parent=11 // pred_check
        %p137 = pneg %p91
      $region18: #{upconv.1} parent=11 // pred_check_branch
        %139 = sbr.rel (%p137) target = $region20
      $region19: #{upconv.1} parent=11 // pred_region
        _
      $region20: #{upconv.1} parent=11 // pred_fallthru
        _
    $region12: #{upconv.1} parent=5 // pred_fallthru
      _
    %p140 = scmp.lt.s32.totalorder %s9, 2
    // Predicated region
    $region21: #{upconv.1} parent=5 // pred_check
      %p141 = pneg %p140
    $region22: #{upconv.1} parent=5 // pred_check_branch
      %143 = sbr.rel (%p141) target = $region24
    $region23: #{upconv.1} parent=5 // pred_region
      // Predicated region
      $region25: #{upconv.1} parent=23 // pred_check
        %p144 = pneg %p43
      $region26: #{upconv.1} parent=23 // pred_check_branch
        %146 = sbr.rel (%p144) target = $region28
      $region27: #{upconv.1} parent=23 // pred_region
        %s147 = smul.u32 8, %s17
        %p148 = scmp.lt.s32.totalorder %s16, 1
        %s149 = scalar_select %p148, %s16, 1
        %p150 = scmp.lt.s32.totalorder %s147, 7
        %s151 = scalar_select %p150, %s147, 7
        %s152 = smul.addr %s149, 8
        %s153 = sadd.s32 %s151, %s152
        %s154 = smul.addr %s153, 4
        %s155 = scalar_lea.vmem %s0, %s154
        %s156 = smul.u32 8, %s17
      $region28: #{upconv.1} parent=23 // pred_fallthru
        _
    $region24: #{upconv.1} parent=5 // pred_fallthru
      _
    %p157 = scmp.le.s32.totalorder 1, %s9
    %p158 = scmp.lt.s32.totalorder %s9, 3
    %p159 = pnand %p157, %p158
    %p160 = pneg %p159
    // Predicated region
    $region29: #{upconv.1} parent=5 // pred_check
      _
    $region30: #{upconv.1} parent=5 // pred_check_branch
      %162 = sbr.rel (%p159) target = $region32
    $region31: #{upconv.1} parent=5 // pred_region
      %s163 = ssub.s32 %s9, 1
      %s164 = smul.u32 8, %s19
      %p165 = scmp.lt.s32.totalorder %s18, 1
      %s166 = scalar_select %p165, %s18, 1
      %p167 = scmp.lt.s32.totalorder %s164, 7
      %s168 = scalar_select %p167, %s164, 7
      %s169 = smul.addr %s166, 8
      %s170 = sadd.s32 %s168, %s169
      %s171 = smul.addr %s170, 4
      %s172 = scalar_lea.vmem %s0, %s171
      %p173 = pneg %p49
      %p174 = pneg %p46
      %p175 = pneg %p70
      %p176 = pneg %p67
      %p177 = pneg %p91
      %p178 = pneg %p88
      %p179 = pneg %p119
      %p180 = pneg %p116
      %s181 = smul.u32 8, %s19
      %p182 = scmp.lt.s32.totalorder %s18, 1
      %s183 = scalar_select %p182, %s18, 1
      %p184 = scmp.lt.s32.totalorder %s181, 7
      %s185 = scalar_select %p184, %s181, 7
      %s186 = smul.addr %s183, 8
      %s187 = sadd.s32 %s185, %s186
      %s188 = smul.addr %s187, 8
      %s189 = scalar_lea.vmem %s3, %s188
      %s190 = smul.u32 8, %s19
      %p191 = scmp.lt.s32.totalorder %s18, 1
      %s192 = scalar_select %p191, %s18, 1
      %p193 = scmp.lt.s32.totalorder %s190, 7
      %s194 = scalar_select %p193, %s190, 7
      %s195 = smul.addr %s192, 8
      %s196 = sadd.s32 %s194, %s195
      %s197 = smul.addr %s196, 4
      %s198 = scalar_lea.vmem %s0, %s197
      %s199 = smul.u32 8, %s19
      %s200 = smul.u32 8, %s19
      %p201 = scmp.lt.s32.totalorder %s18, 1
      %s202 = scalar_select %p201, %s18, 1
      %p203 = scmp.lt.s32.totalorder %s200, 7
      %s204 = scalar_select %p203, %s200, 7
      %s205 = smul.addr %s202, 8
      %s206 = sadd.s32 %s204, %s205
      %s207 = smul.addr %s206, 8
      %s208 = scalar_lea.vmem %s3, %s207
      %s209 = smul.u32 8, %s19
      %v210 = vld [vmem:[%s198] sm:$0xff]
      %v211 = vld [vmem:[%s198 + $0x8] sm:$0xff]
      %v212 = vld [vmem:[%s198 + $0x10] sm:$0xff]
      %v213 = vld [vmem:[%s198 + $0x18] sm:$0xff]
      %v214 = vld [vmem:[%s1] sm:$0xff]
      %v215 = vld [vmem:[%s1 + $0x8] sm:$0xff]
      %v216 = vld [vmem:[%s1 + $0x10] sm:$0xff]
      %v217 = vld [vmem:[%s1 + $0x18] sm:$0xff]
      %v218 = vld [vmem:[%s2] sm:$0xff]
      %v219 = vld [vmem:[%s2 + $0x8] sm:$0xff]
      %v220 = vld [vmem:[%s2 + $0x10] sm:$0xff]
      %v221 = vld [vmem:[%s2 + $0x18] sm:$0xff]
      %223 = vset.pattern.permute.xlu0 0
      %224 = vperm.xlu0 %223, %v218
      %v225 = vpop.permute.xlu0 %224
      %228 = vset.pattern.permute.xlu0 0
      %229 = vperm.xlu0 %228, %v219
      %v230 = vpop.permute.xlu0 %229
      %233 = vset.pattern.permute.xlu0 0
      %234 = vperm.xlu0 %233, %v220
      %v235 = vpop.permute.xlu0 %234
      %238 = vset.pattern.permute.xlu0 0
      %239 = vperm.xlu0 %238, %v221
      %v240 = vpop.permute.xlu0 %239
      %v246 = vcombine.high %v210, %v210
      %v247 = vcombine.high %v211, %v211
      %v248 = vcombine.high %v212, %v212
      %v249 = vcombine.high %v213, %v213
      %vm250 = vcmask 31744
      %v252 = vsel %vm250, %v214, 0
      %v255 = vsel %vm250, %v215, 0
      %v258 = vsel %vm250, %v216, 0
      %v261 = vsel %vm250, %v217, 0
      %vm263 = vcmask 1043456
      %v264 = vsel %vm263, %v210, 0
      %v266 = vsel %vm263, %v246, 0
      %v268 = vsel %vm263, %v211, 0
      %v270 = vsel %vm263, %v247, 0
      %v272 = vsel %vm263, %v212, 0
      %v274 = vsel %vm263, %v248, 0
      %v276 = vsel %vm263, %v213, 0
      %v278 = vsel %vm263, %v249, 0
      %280 = vmatprep.subr.mxu0 0.0
      %281 = vmatpush1.msra.mxu0 0.0
      %282 = vmatprep.subr.mxu0 0.0
      %283 = vmatpush1.msra.mxu0 0.0
      %284 = vmatprep.subr.mxu0 0.0
      %285 = vmatpush1.msra.mxu0 0.0
      %286 = vmatprep.subr.mxu0 0.0
      %287 = vmatpush1.msra.mxu0 0.0
      %288 = vmatprep.subr.mxu0 0.0
      %289 = vmatpush1.msra.mxu0 0.0
      %290 = vmatprep.subr.mxu0 0.0
      %291 = vmatpush1.msra.mxu0 0.0
      %292 = vmatprep.subr.mxu0 0.0
      %293 = vmatpush1.msra.mxu0 0.0
      %294 = vmatprep.subr.mxu0 0.0
      %295 = vmatpush1.msra.mxu0 0.0
      %296 = vmatprep.subr.mxu0 0.0
      %297 = vmatpush1.msra.mxu0 0.0
      %298 = vmatprep.subr.mxu0 0.0
      %299 = vmatpush1.msra.mxu0 0.0
      %300 = vmatprep.subr.mxu0 0.0
      %301 = vmatpush1.msra.mxu0 0.0
      %302 = vmatprep.subr.mxu0 0.0
      %303 = vmatpush1.msra.mxu0 0.0
      %304 = vmatprep.subr.mxu0 0.0
      %305 = vmatpush1.msra.mxu0 0.0
      %306 = vmatprep.subr.mxu0 0.0
      %307 = vmatpush1.msra.mxu0 0.0
      %308 = vmatprep.subr.mxu0 0.0
      %309 = vmatpush1.msra.mxu0 0.0
      %310 = vmatprep.subr.mxu0 %v266
      %311 = vmatpush1.msra.mxu0 %v264
      %312 = vmatprep.subr.mxu0 0.0
      %313 = vmatpush2.msra.mxu0 0.0
      %314 = vmatprep.subr.mxu0 0.0
      %315 = vmatpush2.msra.mxu0 0.0
      %316 = vmatprep.subr.mxu0 0.0
      %317 = vmatpush2.msra.mxu0 0.0
      %318 = vmatprep.subr.mxu0 0.0
      %319 = vmatpush2.msra.mxu0 0.0
      %320 = vmatprep.subr.mxu0 0.0
      %321 = vmatpush2.msra.mxu0 0.0
      %322 = vmatprep.subr.mxu0 0.0
      %323 = vmatpush2.msra.mxu0 0.0
      %324 = vmatprep.subr.mxu0 0.0
      %325 = vmatpush2.msra.mxu0 0.0
      %326 = vmatprep.subr.mxu0 0.0
      %327 = vmatpush2.msra.mxu0 0.0
      %328 = vmatprep.subr.mxu0 0.0
      %329 = vmatpush2.msra.mxu0 0.0
      %330 = vmatprep.subr.mxu0 0.0
      %331 = vmatpush2.msra.mxu0 0.0
      %332 = vmatprep.subr.mxu0 0.0
      %333 = vmatpush2.msra.mxu0 0.0
      %334 = vmatprep.subr.mxu0 0.0
      %335 = vmatpush2.msra.mxu0 0.0
      %336 = vmatprep.subr.mxu0 0.0
      %337 = vmatpush2.msra.mxu0 0.0
      %338 = vmatprep.subr.mxu0 0.0
      %339 = vmatpush2.msra.mxu0 0.0
      %340 = vmatprep.subr.mxu0 0.0
      %341 = vmatpush2.msra.mxu0 0.0
      %342 = vmatprep.subr.mxu0 0.0
      %343 = vmatpush2.msra.mxu0 0.0
      %344 = vmatprep.mubr.f32.mxu0 0.0
      %345 = vmatmul.mubr.f32.gmra.mxu0 %v252
      %v346 = vpop.f32.mrf.mxu0
      %v347 = vadd.f32 %v225, %v346
      %v348 = vpop.f32.mrf.mxu0
      %v349 = vadd.f32 %v225, %v348
      %350 = vmatprep.mubr.f32.mxu0 0.0
      %351 = vmatmul.mubr.f32.gmra.mxu0 %v255
      %v352 = vpop.f32.mrf.mxu0
      %v353 = vadd.f32 %v230, %v352
      %v354 = vpop.f32.mrf.mxu0
      %v355 = vadd.f32 %v230, %v354
      %356 = vmatprep.mubr.f32.mxu0 0.0
      %357 = vmatmul.mubr.f32.gmra.mxu0 %v258
      %v358 = vpop.f32.mrf.mxu0
      %v359 = vadd.f32 %v235, %v358
      %v360 = vpop.f32.mrf.mxu0
      %v361 = vadd.f32 %v235, %v360
      %362 = vmatprep.mubr.f32.mxu0 0.0
      %363 = vmatmul.mubr.f32.gmra.mxu0 %v261
      %v364 = vpop.f32.mrf.mxu0
      %v365 = vadd.f32 %v240, %v364
      %v366 = vpop.f32.mrf.mxu0
      %v367 = vadd.f32 %v240, %v366
      %368 = vdwg.mxu0
      %369 = vmatprep.subr.mxu0 0.0
      %370 = vmatpush1.msra.mxu0 0.0
      %371 = vmatprep.subr.mxu0 0.0
      %372 = vmatpush1.msra.mxu0 0.0
      %373 = vmatprep.subr.mxu0 0.0
      %374 = vmatpush1.msra.mxu0 0.0
      %375 = vmatprep.subr.mxu0 0.0
      %376 = vmatpush1.msra.mxu0 0.0
      %377 = vmatprep.subr.mxu0 0.0
      %378 = vmatpush1.msra.mxu0 0.0
      %379 = vmatprep.subr.mxu0 0.0
      %380 = vmatpush1.msra.mxu0 0.0
      %381 = vmatprep.subr.mxu0 0.0
      %382 = vmatpush1.msra.mxu0 0.0
      %383 = vmatprep.subr.mxu0 0.0
      %384 = vmatpush1.msra.mxu0 0.0
      %385 = vmatprep.subr.mxu0 0.0
      %386 = vmatpush1.msra.mxu0 0.0
      %387 = vmatprep.subr.mxu0 0.0
      %388 = vmatpush1.msra.mxu0 0.0
      %389 = vmatprep.subr.mxu0 0.0
      %390 = vmatpush1.msra.mxu0 0.0
      %391 = vmatprep.subr.mxu0 0.0
      %392 = vmatpush1.msra.mxu0 0.0
      %393 = vmatprep.subr.mxu0 0.0
      %394 = vmatpush1.msra.mxu0 0.0
      %395 = vmatprep.subr.mxu0 0.0
      %396 = vmatpush1.msra.mxu0 0.0
      %397 = vmatprep.subr.mxu0 0.0
      %398 = vmatpush1.msra.mxu0 0.0
      %399 = vmatprep.subr.mxu0 %v270
      %400 = vmatpush1.msra.mxu0 %v268
      %401 = vmatprep.subr.mxu0 0.0
      %402 = vmatpush2.msra.mxu0 0.0
      %403 = vmatprep.subr.mxu0 0.0
      %404 = vmatpush2.msra.mxu0 0.0
      %405 = vmatprep.subr.mxu0 0.0
      %406 = vmatpush2.msra.mxu0 0.0
      %407 = vmatprep.subr.mxu0 0.0
      %408 = vmatpush2.msra.mxu0 0.0
      %409 = vmatprep.subr.mxu0 0.0
      %410 = vmatpush2.msra.mxu0 0.0
      %411 = vmatprep.subr.mxu0 0.0
      %412 = vmatpush2.msra.mxu0 0.0
      %413 = vmatprep.subr.mxu0 0.0
      %414 = vmatpush2.msra.mxu0 0.0
      %415 = vmatprep.subr.mxu0 0.0
      %416 = vmatpush2.msra.mxu0 0.0
      %417 = vmatprep.subr.mxu0 0.0
      %418 = vmatpush2.msra.mxu0 0.0
      %419 = vmatprep.subr.mxu0 0.0
      %420 = vmatpush2.msra.mxu0 0.0
      %421 = vmatprep.subr.mxu0 0.0
      %422 = vmatpush2.msra.mxu0 0.0
      %423 = vmatprep.subr.mxu0 0.0
      %424 = vmatpush2.msra.mxu0 0.0
      %425 = vmatprep.subr.mxu0 0.0
      %426 = vmatpush2.msra.mxu0 0.0
      %427 = vmatprep.subr.mxu0 0.0
      %428 = vmatpush2.msra.mxu0 0.0
      %429 = vmatprep.subr.mxu0 0.0
      %430 = vmatpush2.msra.mxu0 0.0
      %431 = vmatprep.subr.mxu0 0.0
      %432 = vmatpush2.msra.mxu0 0.0
      %433 = vmatprep.mubr.f32.mxu0 0.0
      %434 = vmatmul.mubr.f32.gmra.mxu0 %v252
      %v435 = vpop.f32.mrf.mxu0
      %v436 = vadd.f32 %v225, %v435
      %v437 = vpop.f32.mrf.mxu0
      %v438 = vadd.f32 %v225, %v437
      %439 = vmatprep.mubr.f32.mxu0 0.0
      %440 = vmatmul.mubr.f32.gmra.mxu0 %v255
      %v441 = vpop.f32.mrf.mxu0
      %v442 = vadd.f32 %v230, %v441
      %v443 = vpop.f32.mrf.mxu0
      %v444 = vadd.f32 %v230, %v443
      %445 = vmatprep.mubr.f32.mxu0 0.0
      %446 = vmatmul.mubr.f32.gmra.mxu0 %v258
      %v447 = vpop.f32.mrf.mxu0
      %v448 = vadd.f32 %v235, %v447
      %v449 = vpop.f32.mrf.mxu0
      %v450 = vadd.f32 %v235, %v449
      %451 = vmatprep.mubr.f32.mxu0 0.0
      %452 = vmatmul.mubr.f32.gmra.mxu0 %v261
      %v453 = vpop.f32.mrf.mxu0
      %v454 = vadd.f32 %v240, %v453
      %v455 = vpop.f32.mrf.mxu0
      %v456 = vadd.f32 %v240, %v455
      %457 = vdwg.mxu0
      %458 = vmatprep.subr.mxu0 0.0
      %459 = vmatpush1.msra.mxu0 0.0
      %460 = vmatprep.subr.mxu0 0.0
      %461 = vmatpush1.msra.mxu0 0.0
      %462 = vmatprep.subr.mxu0 0.0
      %463 = vmatpush1.msra.mxu0 0.0
      %464 = vmatprep.subr.mxu0 0.0
      %465 = vmatpush1.msra.mxu0 0.0
      %466 = vmatprep.subr.mxu0 0.0
      %467 = vmatpush1.msra.mxu0 0.0
      %468 = vmatprep.subr.mxu0 0.0
      %469 = vmatpush1.msra.mxu0 0.0
      %470 = vmatprep.subr.mxu0 0.0
      %471 = vmatpush1.msra.mxu0 0.0
      %472 = vmatprep.subr.mxu0 0.0
      %473 = vmatpush1.msra.mxu0 0.0
      %474 = vmatprep.subr.mxu0 0.0
      %475 = vmatpush1.msra.mxu0 0.0
      %476 = vmatprep.subr.mxu0 0.0
      %477 = vmatpush1.msra.mxu0 0.0
      %478 = vmatprep.subr.mxu0 0.0
      %479 = vmatpush1.msra.mxu0 0.0
      %480 = vmatprep.subr.mxu0 0.0
      %481 = vmatpush1.msra.mxu0 0.0
      %482 = vmatprep.subr.mxu0 0.0
      %483 = vmatpush1.msra.mxu0 0.0
      %484 = vmatprep.subr.mxu0 0.0
      %485 = vmatpush1.msra.mxu0 0.0
      %486 = vmatprep.subr.mxu0 0.0
      %487 = vmatpush1.msra.mxu0 0.0
      %488 = vmatprep.subr.mxu0 %v274
      %489 = vmatpush1.msra.mxu0 %v272
      %490 = vmatprep.subr.mxu0 0.0
      %491 = vmatpush2.msra.mxu0 0.0
      %492 = vmatprep.subr.mxu0 0.0
      %493 = vmatpush2.msra.mxu0 0.0
      %494 = vmatprep.subr.mxu0 0.0
      %495 = vmatpush2.msra.mxu0 0.0
      %496 = vmatprep.subr.mxu0 0.0
      %497 = vmatpush2.msra.mxu0 0.0
      %498 = vmatprep.subr.mxu0 0.0
      %499 = vmatpush2.msra.mxu0 0.0
      %500 = vmatprep.subr.mxu0 0.0
      %501 = vmatpush2.msra.mxu0 0.0
      %502 = vmatprep.subr.mxu0 0.0
      %503 = vmatpush2.msra.mxu0 0.0
      %504 = vmatprep.subr.mxu0 0.0
      %505 = vmatpush2.msra.mxu0 0.0
      %506 = vmatprep.subr.mxu0 0.0
      %507 = vmatpush2.msra.mxu0 0.0
      %508 = vmatprep.subr.mxu0 0.0
      %509 = vmatpush2.msra.mxu0 0.0
      %510 = vmatprep.subr.mxu0 0.0
      %511 = vmatpush2.msra.mxu0 0.0
      %512 = vmatprep.subr.mxu0 0.0
      %513 = vmatpush2.msra.mxu0 0.0
      %514 = vmatprep.subr.mxu0 0.0
      %515 = vmatpush2.msra.mxu0 0.0
      %516 = vmatprep.subr.mxu0 0.0
      %517 = vmatpush2.msra.mxu0 0.0
      %518 = vmatprep.subr.mxu0 0.0
      %519 = vmatpush2.msra.mxu0 0.0
      %520 = vmatprep.subr.mxu0 0.0
      %521 = vmatpush2.msra.mxu0 0.0
      %522 = vmatprep.mubr.f32.mxu0 0.0
      %523 = vmatmul.mubr.f32.gmra.mxu0 %v252
      %v524 = vpop.f32.mrf.mxu0
      %v525 = vadd.f32 %v225, %v524
      %v526 = vpop.f32.mrf.mxu0
      %v527 = vadd.f32 %v225, %v526
      %528 = vmatprep.mubr.f32.mxu0 0.0
      %529 = vmatmul.mubr.f32.gmra.mxu0 %v255
      %v530 = vpop.f32.mrf.mxu0
      %v531 = vadd.f32 %v230, %v530
      %v532 = vpop.f32.mrf.mxu0
      %v533 = vadd.f32 %v230, %v532
      %534 = vmatprep.mubr.f32.mxu0 0.0
      %535 = vmatmul.mubr.f32.gmra.mxu0 %v258
      %v536 = vpop.f32.mrf.mxu0
      %v537 = vadd.f32 %v235, %v536
      %v538 = vpop.f32.mrf.mxu0
      %v539 = vadd.f32 %v235, %v538
      %540 = vmatprep.mubr.f32.mxu0 0.0
      %541 = vmatmul.mubr.f32.gmra.mxu0 %v261
      %v542 = vpop.f32.mrf.mxu0
      %v543 = vadd.f32 %v240, %v542
      %v544 = vpop.f32.mrf.mxu0
      %v545 = vadd.f32 %v240, %v544
      %546 = vdwg.mxu0
      %547 = vmatprep.subr.mxu0 0.0
      %548 = vmatpush1.msra.mxu0 0.0
      %549 = vmatprep.subr.mxu0 0.0
      %550 = vmatpush1.msra.mxu0 0.0
      %551 = vmatprep.subr.mxu0 0.0
      %552 = vmatpush1.msra.mxu0 0.0
      %553 = vmatprep.subr.mxu0 0.0
      %554 = vmatpush1.msra.mxu0 0.0
      %555 = vmatprep.subr.mxu0 0.0
      %556 = vmatpush1.msra.mxu0 0.0
      %557 = vmatprep.subr.mxu0 0.0
      %558 = vmatpush1.msra.mxu0 0.0
      %559 = vmatprep.subr.mxu0 0.0
      %560 = vmatpush1.msra.mxu0 0.0
      %561 = vmatprep.subr.mxu0 0.0
      %562 = vmatpush1.msra.mxu0 0.0
      %563 = vmatprep.subr.mxu0 0.0
      %564 = vmatpush1.msra.mxu0 0.0
      %565 = vmatprep.subr.mxu0 0.0
      %566 = vmatpush1.msra.mxu0 0.0
      %567 = vmatprep.subr.mxu0 0.0
      %568 = vmatpush1.msra.mxu0 0.0
      %569 = vmatprep.subr.mxu0 0.0
      %570 = vmatpush1.msra.mxu0 0.0
      %571 = vmatprep.subr.mxu0 0.0
      %572 = vmatpush1.msra.mxu0 0.0
      %573 = vmatprep.subr.mxu0 0.0
      %574 = vmatpush1.msra.mxu0 0.0
      %575 = vmatprep.subr.mxu0 0.0
      %576 = vmatpush1.msra.mxu0 0.0
      %577 = vmatprep.subr.mxu0 %v278
      %578 = vmatpush1.msra.mxu0 %v276
      %579 = vmatprep.subr.mxu0 0.0
      %580 = vmatpush2.msra.mxu0 0.0
      %581 = vmatprep.subr.mxu0 0.0
      %582 = vmatpush2.msra.mxu0 0.0
      %583 = vmatprep.subr.mxu0 0.0
      %584 = vmatpush2.msra.mxu0 0.0
      %585 = vmatprep.subr.mxu0 0.0
      %586 = vmatpush2.msra.mxu0 0.0
      %587 = vmatprep.subr.mxu0 0.0
      %588 = vmatpush2.msra.mxu0 0.0
      %589 = vmatprep.subr.mxu0 0.0
      %590 = vmatpush2.msra.mxu0 0.0
      %591 = vmatprep.subr.mxu0 0.0
      %592 = vmatpush2.msra.mxu0 0.0
      %593 = vmatprep.subr.mxu0 0.0
      %594 = vmatpush2.msra.mxu0 0.0
      %595 = vmatprep.subr.mxu0 0.0
      %596 = vmatpush2.msra.mxu0 0.0
      %597 = vmatprep.subr.mxu0 0.0
      %598 = vmatpush2.msra.mxu0 0.0
      %599 = vmatprep.subr.mxu0 0.0
      %600 = vmatpush2.msra.mxu0 0.0
      %601 = vmatprep.subr.mxu0 0.0
      %602 = vmatpush2.msra.mxu0 0.0
      %603 = vmatprep.subr.mxu0 0.0
      %604 = vmatpush2.msra.mxu0 0.0
      %605 = vmatprep.subr.mxu0 0.0
      %606 = vmatpush2.msra.mxu0 0.0
      %607 = vmatprep.subr.mxu0 0.0
      %608 = vmatpush2.msra.mxu0 0.0
      %609 = vmatprep.subr.mxu0 0.0
      %610 = vmatpush2.msra.mxu0 0.0
      %611 = vmatprep.mubr.f32.mxu0 0.0
      %612 = vmatmul.mubr.f32.gmra.mxu0 %v252
      %v613 = vpop.f32.mrf.mxu0
      %v614 = vadd.f32 %v225, %v613
      %v615 = vpop.f32.mrf.mxu0
      %v616 = vadd.f32 %v225, %v615
      %617 = vmatprep.mubr.f32.mxu0 0.0
      %618 = vmatmul.mubr.f32.gmra.mxu0 %v255
      %v619 = vpop.f32.mrf.mxu0
      %v620 = vadd.f32 %v230, %v619
      %v621 = vpop.f32.mrf.mxu0
      %v622 = vadd.f32 %v230, %v621
      %623 = vmatprep.mubr.f32.mxu0 0.0
      %624 = vmatmul.mubr.f32.gmra.mxu0 %v258
      %v625 = vpop.f32.mrf.mxu0
      %v626 = vadd.f32 %v235, %v625
      %v627 = vpop.f32.mrf.mxu0
      %v628 = vadd.f32 %v235, %v627
      %629 = vmatprep.mubr.f32.mxu0 0.0
      %630 = vmatmul.mubr.f32.gmra.mxu0 %v261
      %v631 = vpop.f32.mrf.mxu0
      %v632 = vadd.f32 %v240, %v631
      %v633 = vpop.f32.mrf.mxu0
      %v634 = vadd.f32 %v240, %v633
      %635 = vdwg.mxu0
      %v636 = vlaneseq
      %v637 = vand.u32 %v636, 127
      %v638 = vadd.s32 %v637, 128
      %v639 = vadd.s32 %v637, 256
      %v640 = vadd.s32 %v637, 384
      %v641 = vadd.s32 %v637, 512
      %v642 = vadd.s32 %v637, 640
      %v643 = vadd.s32 %v637, 768
      %v644 = vadd.s32 %v637, 896
      %s645 = smul.u32 %s19, 1024
      %v646 = vstv %s645
      %v647 = vadd.s32 %v637, %v646
      %v648 = vadd.s32 %v638, %v646
      %v649 = vadd.s32 %v639, %v646
      %v650 = vadd.s32 %v640, %v646
      %v651 = vadd.s32 %v641, %v646
      %v652 = vadd.s32 %v642, %v646
      %v653 = vadd.s32 %v643, %v646
      %v654 = vadd.s32 %v644, %v646
      %v655 = vand.u32 %v647, 1
      %v656 = vand.u32 %v648, 1
      %v657 = vand.u32 %v649, 1
      %v658 = vand.u32 %v650, 1
      %v659 = vand.u32 %v651, 1
      %v660 = vand.u32 %v652, 1
      %v661 = vand.u32 %v653, 1
      %v662 = vand.u32 %v654, 1
      %vm663 = vcmp.eq.s32.totalorder %v655, 1
      %vm664 = vcmp.eq.s32.totalorder %v656, 1
      %vm665 = vcmp.eq.s32.totalorder %v657, 1
      %vm666 = vcmp.eq.s32.totalorder %v658, 1
      %vm667 = vcmp.eq.s32.totalorder %v659, 1
      %vm668 = vcmp.eq.s32.totalorder %v660, 1
      %vm669 = vcmp.eq.s32.totalorder %v661, 1
      %vm670 = vcmp.eq.s32.totalorder %v662, 1
      %v671 = vshra.s32 %v647, 5
      %v672 = vshra.s32 %v648, 5
      %v673 = vshra.s32 %v649, 5
      %v674 = vshra.s32 %v650, 5
      %v675 = vshra.s32 %v651, 5
      %v676 = vshra.s32 %v652, 5
      %v677 = vshra.s32 %v653, 5
      %v678 = vshra.s32 %v654, 5
      %v679 = vand.u32 %v671, 1
      %v680 = vand.u32 %v672, 1
      %v681 = vand.u32 %v673, 1
      %v682 = vand.u32 %v674, 1
      %v683 = vand.u32 %v675, 1
      %v684 = vand.u32 %v676, 1
      %v685 = vand.u32 %v677, 1
      %v686 = vand.u32 %v678, 1
      %vm687 = vcmp.eq.s32.totalorder %v679, 1
      %vm688 = vcmp.eq.s32.totalorder %v680, 1
      %vm689 = vcmp.eq.s32.totalorder %v681, 1
      %vm690 = vcmp.eq.s32.totalorder %v682, 1
      %vm691 = vcmp.eq.s32.totalorder %v683, 1
      %vm692 = vcmp.eq.s32.totalorder %v684, 1
      %vm693 = vcmp.eq.s32.totalorder %v685, 1
      %vm694 = vcmp.eq.s32.totalorder %v686, 1
      %v695 = vsel %vm663, 1, 0
      %v696 = vsel %vm664, 1, 0
      %v697 = vsel %vm665, 1, 0
      %v698 = vsel %vm666, 1, 0
      %v699 = vsel %vm667, 1, 0
      %v700 = vsel %vm668, 1, 0
      %v701 = vsel %vm669, 1, 0
      %v702 = vsel %vm670, 1, 0
      %vm703 = vcmp.eq.s32.totalorder %v695, 1
      %vm704 = vcmp.eq.s32.totalorder %v696, 1
      %vm705 = vcmp.eq.s32.totalorder %v697, 1
      %vm706 = vcmp.eq.s32.totalorder %v698, 1
      %vm707 = vcmp.eq.s32.totalorder %v699, 1
      %vm708 = vcmp.eq.s32.totalorder %v700, 1
      %vm709 = vcmp.eq.s32.totalorder %v701, 1
      %vm710 = vcmp.eq.s32.totalorder %v702, 1
      %v711 = vsel %vm703, %v353, %v347
      %v712 = vsel %vm704, %v355, %v349
      %v713 = vsel %vm705, %v442, %v436
      %v714 = vsel %vm706, %v444, %v438
      %v715 = vsel %vm707, %v531, %v525
      %v716 = vsel %vm708, %v533, %v527
      %v717 = vsel %vm709, %v620, %v614
      %v718 = vsel %vm710, %v622, %v616
      %v719 = vsel %vm703, %v365, %v359
      %v720 = vsel %vm704, %v367, %v361
      %v721 = vsel %vm705, %v454, %v448
      %v722 = vsel %vm706, %v456, %v450
      %v723 = vsel %vm707, %v543, %v537
      %v724 = vsel %vm708, %v545, %v539
      %v725 = vsel %vm709, %v632, %v626
      %v726 = vsel %vm710, %v634, %v628
      %v727 = vsel %vm687, 1, 0
      %v728 = vsel %vm688, 1, 0
      %v729 = vsel %vm689, 1, 0
      %v730 = vsel %vm690, 1, 0
      %v731 = vsel %vm691, 1, 0
      %v732 = vsel %vm692, 1, 0
      %v733 = vsel %vm693, 1, 0
      %v734 = vsel %vm694, 1, 0
      %vm735 = vcmp.eq.s32.totalorder %v727, 1
      %vm736 = vcmp.eq.s32.totalorder %v728, 1
      %vm737 = vcmp.eq.s32.totalorder %v729, 1
      %vm738 = vcmp.eq.s32.totalorder %v730, 1
      %vm739 = vcmp.eq.s32.totalorder %v731, 1
      %vm740 = vcmp.eq.s32.totalorder %v732, 1
      %vm741 = vcmp.eq.s32.totalorder %v733, 1
      %vm742 = vcmp.eq.s32.totalorder %v734, 1
      %v743 = vsel %vm735, %v719, %v711
      %v744 = vsel %vm736, %v720, %v712
      %v745 = vsel %vm737, %v721, %v713
      %v746 = vsel %vm738, %v722, %v714
      %v747 = vsel %vm739, %v723, %v715
      %v748 = vsel %vm740, %v724, %v716
      %v749 = vsel %vm741, %v725, %v717
      %v750 = vsel %vm742, %v726, %v718
      %v751 = vmax.f32 %v743, 0.0
      %v752 = vmax.f32 %v744, 0.0
      %v753 = vmax.f32 %v745, 0.0
      %v754 = vmax.f32 %v746, 0.0
      %v755 = vmax.f32 %v747, 0.0
      %v756 = vmax.f32 %v748, 0.0
      %v757 = vmax.f32 %v749, 0.0
      %v758 = vmax.f32 %v750, 0.0
      %759 = vst [vmem:[%s208] sm:$0xff] %v751
      %760 = vst [vmem:[%s208 + $0x8] sm:$0xff] %v752
      %761 = vst [vmem:[%s208 + $0x10] sm:$0xff] %v753
      %762 = vst [vmem:[%s208 + $0x18] sm:$0xff] %v754
      %763 = vst [vmem:[%s208 + $0x20] sm:$0xff] %v755
      %764 = vst [vmem:[%s208 + $0x28] sm:$0xff] %v756
      %765 = vst [vmem:[%s208 + $0x30] sm:$0xff] %v757
      %766 = vst [vmem:[%s208 + $0x38] sm:$0xff] %v758
      %s767 = smul.u32 8, %s19
      %p768 = scmp.lt.s32.totalorder %s18, 1
      %s769 = scalar_select %p768, %s18, 1
      %p770 = scmp.lt.s32.totalorder %s767, 7
      %s771 = scalar_select %p770, %s767, 7
      %s772 = smul.addr %s769, 8
      %s773 = sadd.s32 %s771, %s772
      %s774 = smul.addr %s773, 8
      %s775 = scalar_lea.vmem %s3, %s774
      // Predicated region
      $region33: #{upconv.1} parent=31 // pred_check
        %p776 = pneg %p116
      $region34: #{upconv.1} parent=31 // pred_check_branch
        %778 = sbr.rel (%p776) target = $region36
      $region35: #{upconv.1} parent=31 // pred_region
        %s779 = smul.u32 8, %s19
      $region36: #{upconv.1} parent=31 // pred_fallthru
        _
    $region32: #{upconv.1} parent=5 // pred_fallthru
      _
    %p780 = scmp.le.s32.totalorder 2, %s9
    // Predicated region
    $region37: #{upconv.1} parent=5 // pred_check
      %p781 = pneg %p780
    $region38: #{upconv.1} parent=5 // pred_check_branch
      %783 = sbr.rel (%p781) target = $region40
    $region39: #{upconv.1} parent=5 // pred_region
      %s784 = ssub.s32 %s9, 2
      // Predicated region
      $region41: #{upconv.1} parent=39 // pred_check
        %p785 = pneg %p122
      $region42: #{upconv.1} parent=39 // pred_check_branch
        %787 = sbr.rel (%p785) target = $region44
      $region43: #{upconv.1} parent=39 // pred_region
        %s788 = smul.u32 8, %s21
        %p789 = scmp.lt.s32.totalorder %s20, 1
        %s790 = scalar_select %p789, %s20, 1
        %p791 = scmp.lt.s32.totalorder %s788, 7
        %s792 = scalar_select %p791, %s788, 7
        %s793 = smul.addr %s790, 8
        %s794 = sadd.s32 %s792, %s793
        %s795 = smul.addr %s794, 8
        %s796 = scalar_lea.vmem %s3, %s795
      $region44: #{upconv.1} parent=39 // pred_fallthru
        _
    $region40: #{upconv.1} parent=5 // pred_fallthru
      _
  $region6: #{upconv.1} parent=0 // loop_footer
    %s13 = sadd.s32 1, %s9
  $region7: #{upconv.1} parent=0 // loop_footer_branch
    %8 = sbr.rel target = $region3
  $region8: #{upconv.1} parent=0 // loop_exit
    _

</llo_original>
